<compile_context>
chip_gen: v6e
topology: v6e:2x2x1
jax: 0.10.0
libtpu: 0.0.40
codegen_flags: <defaults>
</compile_context>

<pallas_src>
import functools

import jax
import jax.numpy as jnp
from jax.experimental import pallas as pl
from jax.experimental.pallas import tpu as pltpu

_LANE = 128
_ROW_ALIGN = 16          # sublane granularity safe for both f32 and bf16 tiles
_MAX_TB = 4096           # rows per grid step (few MiB of VMEM at these widths)


def _round_up(x, m):
    return ((x + m - 1) // m) * m


def _cdiv(a, b):
    return (a + b - 1) // b


def _pad2d(a, rows, cols):
    return jnp.pad(a, ((0, rows - a.shape[0]), (0, cols - a.shape[1])))


def _mlp_kernel(n_layers, x_ref, *refs):
    """Fused MLP forward on one batch tile.

    refs = (w_0, b_0, w_1, b_1, ..., w_{L-1}, b_{L-1}, out_ref)
      w_i : [in_i_padded, out_i_padded]  bf16 (transposed vs. PyTorch, zero-padded;
            last layer's output width is the true ac_dim, unpadded)
      b_i : [1, out_i_padded]            f32  (zero-padded)
    ReLU after every layer except the last (the `output` Linear).
    Matmuls run with bf16 operands on the MXU, f32 accumulation; bias-add and
    ReLU stay in f32.
    """
    out_ref = refs[-1]
    param_refs = refs[:-1]

    h = x_ref[...].astype(jnp.bfloat16)
    for i in range(n_layers):
        w = param_refs[2 * i][...]        # bf16
        b = param_refs[2 * i + 1][...]    # f32
        acc = jnp.dot(h, w, preferred_element_type=jnp.float32) + b
        if i < n_layers - 1:              # hidden layers get the ReLU activation
            h = jnp.maximum(acc, 0.0).astype(jnp.bfloat16)
        else:
            h = acc                       # final logits, f32
    out_ref[...] = h.astype(out_ref.dtype)


def policy_forward(x, weights, biases):
    """Run the fused Policy MLP kernel.

    x       : [batch, ob_dim] float32
    weights : list of [in_i, out_i] float32 (transposed PyTorch weights)
    biases  : list of [out_i] float32
    returns : [batch, ac_dim] float32 (logits)
    """
    n_layers = len(weights)
    batch, ob_dim = x.shape
    ac_dim = weights[-1].shape[1]

    # ---- feature widths: pad hidden layers to 128 lanes, keep input and ------
    # ---- output widths at their true (narrow) sizes --------------------------
    dims = [ob_dim] + [w.shape[1] for w in weights]
    padded = [ob_dim] + [_round_up(d, _LANE) for d in dims[1:-1]] + [ac_dim]

    params = []
    for i, (w, b) in enumerate(zip(weights, biases)):
        in_p, out_p = padded[i], padded[i + 1]
        params.append(_pad2d(w, in_p, out_p).astype(jnp.bfloat16))       # weight
        params.append(_pad2d(b.reshape(1, -1), 1, out_p).astype(jnp.float32))  # bias

    # ---- batch tiling ---------------------------------------------------------
    # Big tiles amortize the ~0.35 us per-grid-step overhead; keep >= 2 (even)
    # steps whenever the batch allows so v7x megacore can shard the grid.
    n_steps = max(1, _cdiv(batch, _MAX_TB))
    if batch > _ROW_ALIGN and n_steps < 2:
        n_steps = 2
    if n_steps > 1 and n_steps % 2 == 1:
        n_steps += 1
    tb = max(_ROW_ALIGN, _round_up(_cdiv(batch, n_steps), _ROW_ALIGN))
    batch_p = tb * n_steps
    x_p = x if batch_p == batch else jnp.pad(x, ((0, batch_p - batch), (0, 0)))
    grid = (n_steps,)

    kernel = functools.partial(_mlp_kernel, n_layers)

    in_specs = [pl.BlockSpec((tb, ob_dim), lambda i: (i, 0))]
    for p in params:
        # Constant index_map -> params DMA'd once and stay VMEM-resident.
        in_specs.append(pl.BlockSpec(p.shape, lambda i: (0, 0)))

    out = pl.pallas_call(
        kernel,
        out_shape=jax.ShapeDtypeStruct((batch_p, ac_dim), jnp.float32),
        grid=grid,
        in_specs=in_specs,
        out_specs=pl.BlockSpec((tb, ac_dim), lambda i: (i, 0)),
        compiler_params=pltpu.CompilerParams(
            dimension_semantics=("parallel",),
            vmem_limit_bytes=32 * 1024 * 1024,
        ),
    )(x_p, *params)

    return out[:batch]


def _init_linear(key, in_dim, out_dim):
    """Deterministic init mimicking torch.nn.Linear default (U[-1/sqrt(in), 1/sqrt(in)])."""
    kw, kb = jax.random.split(key)
    bound = 1.0 / jnp.sqrt(jnp.float32(in_dim))
    # Weight stored as [in_dim, out_dim] (transposed vs. PyTorch's [out, in]).
    w = jax.random.uniform(kw, (in_dim, out_dim), jnp.float32, -bound, bound)
    b = jax.random.uniform(kb, (out_dim,), jnp.float32, -bound, bound)
    return w, b


def _reference_forward(x, weights, biases):
    """Pure-f32 JAX reference of the PyTorch forward."""
    h = x
    n = len(weights)
    for i, (w, b) in enumerate(zip(weights, biases)):
        h = h @ w + b
        if i < n - 1:
            h = jnp.maximum(h, 0.0)
    return h


if __name__ == "__main__":
    # Module-consistent shapes: ob_dim=16, nn_sizes=[32, 32], ac_dim=4 (discrete).
    batch, ob_dim, ac_dim = 8, 16, 4
    nn_sizes = [32, 32]
    layer_sizes = [ob_dim] + nn_sizes + [ac_dim]

    key = jax.random.PRNGKey(0)
    key, xkey = jax.random.split(key)
    x = jax.random.normal(xkey, (batch, ob_dim), jnp.float32)

    weights, biases = [], []
    for i in range(len(layer_sizes) - 1):
        key, lkey = jax.random.split(key)
        w, b = _init_linear(lkey, layer_sizes[i], layer_sizes[i + 1])
        weights.append(w)
        biases.append(b)

    # Small-batch path (single grid step, padded batch rows).
    out = jax.block_until_ready(policy_forward(x, weights, biases))
    ref = _reference_forward(x, weights, biases)
    assert out.shape == (batch, ac_dim), out.shape
    # Tolerance relaxed for bf16 MXU operands (f32 accumulation).
    assert jnp.allclose(out, ref, atol=5e-2, rtol=5e-2), "mismatch vs. JAX reference (small batch)"

    # Large-batch path (exercises batch grid + ragged padding + parallel semantics).
    key, xkey2 = jax.random.split(key)
    x_big = jax.random.normal(xkey2, (1000, ob_dim), jnp.float32)
    out_big = jax.block_until_ready(policy_forward(x_big, weights, biases))
    ref_big = _reference_forward(x_big, weights, biases)
    assert out_big.shape == (1000, ac_dim), out_big.shape
    assert jnp.allclose(out_big, ref_big, atol=5e-2, rtol=5e-2), "mismatch vs. JAX reference (big batch)"

    print("KERNEL_OK")
</pallas_src>

<mosaic_0001>
module attributes {stable_mosaic.version = 11 : i64} {
  func.func @_mlp_kernel(%arg0: i32, %arg1: memref<16x16xf32, #tpu.memory_space<vmem>>, %arg2: memref<16x128xbf16, #tpu.memory_space<vmem>>, %arg3: memref<1x128xf32, #tpu.memory_space<vmem>>, %arg4: memref<128x128xbf16, #tpu.memory_space<vmem>>, %arg5: memref<1x128xf32, #tpu.memory_space<vmem>>, %arg6: memref<128x4xbf16, #tpu.memory_space<vmem>>, %arg7: memref<1x4xf32, #tpu.memory_space<vmem>>, %arg8: memref<16x4xf32, #tpu.memory_space<vmem>>) attributes {dimension_semantics = [#tpu.dimension_semantics<parallel>], iteration_bounds = array<i64: 1>, scalar_prefetch = 0 : i64, scratch_operands = 0 : i64, tpu.core_type = #tpu.core_type<tc>, window_params = [{transform_indices = @transform_0, window_bounds = array<i64: 16, 16>}, {pipeline_mode = #tpu.pipeline_mode<synchronous>, transform_indices = @transform_1, window_bounds = array<i64: 16, 128>}, {pipeline_mode = #tpu.pipeline_mode<synchronous>, transform_indices = @transform_2, window_bounds = array<i64: 1, 128>}, {pipeline_mode = #tpu.pipeline_mode<synchronous>, transform_indices = @transform_3, window_bounds = array<i64: 128, 128>}, {pipeline_mode = #tpu.pipeline_mode<synchronous>, transform_indices = @transform_4, window_bounds = array<i64: 1, 128>}, {pipeline_mode = #tpu.pipeline_mode<synchronous>, transform_indices = @transform_5, window_bounds = array<i64: 128, 4>}, {pipeline_mode = #tpu.pipeline_mode<synchronous>, transform_indices = @transform_6, window_bounds = array<i64: 1, 4>}, {transform_indices = @transform_7, window_bounds = array<i64: 16, 4>}]} {
    %c0 = arith.constant 0 : index
    %c0_0 = arith.constant 0 : index
    %0 = vector.load %arg1[%c0, %c0_0] : memref<16x16xf32, #tpu.memory_space<vmem>>, vector<16x16xf32>
    %1 = arith.truncf %0 : vector<16x16xf32> to vector<16x16xbf16>
    %c0_1 = arith.constant 0 : index
    %c0_2 = arith.constant 0 : index
    %2 = vector.load %arg2[%c0_1, %c0_2] : memref<16x128xbf16, #tpu.memory_space<vmem>>, vector<16x128xbf16>
    %c0_3 = arith.constant 0 : index
    %c0_4 = arith.constant 0 : index
    %3 = vector.load %arg3[%c0_3, %c0_4] : memref<1x128xf32, #tpu.memory_space<vmem>>, vector<1x128xf32>
    %cst = arith.constant dense<0.000000e+00> : vector<16x128xf32>
    %4 = tpu.matmul %1, %2, %cst {dimension_numbers = #tpu.dot_dimension_numbers<[1], [0], [0], [1], [0, 0, 1, 1], [], []>} : vector<16x16xbf16>, vector<16x128xbf16>, vector<16x128xf32> -> vector<16x128xf32>
    %5 = vector.broadcast %3 : vector<1x128xf32> to vector<16x128xf32>
    %6 = arith.addf %4, %5 : vector<16x128xf32>
    %cst_5 = arith.constant 0.000000e+00 : f32
    %7 = vector.broadcast %cst_5 : f32 to vector<16x128xf32>
    %8 = arith.maximumf %6, %7 : vector<16x128xf32>
    %9 = arith.truncf %8 : vector<16x128xf32> to vector<16x128xbf16>
    %c0_6 = arith.constant 0 : index
    %c0_7 = arith.constant 0 : index
    %10 = vector.load %arg4[%c0_6, %c0_7] : memref<128x128xbf16, #tpu.memory_space<vmem>>, vector<128x128xbf16>
    %c0_8 = arith.constant 0 : index
    %c0_9 = arith.constant 0 : index
    %11 = vector.load %arg5[%c0_8, %c0_9] : memref<1x128xf32, #tpu.memory_space<vmem>>, vector<1x128xf32>
    %cst_10 = arith.constant dense<0.000000e+00> : vector<16x128xf32>
    %12 = tpu.matmul %9, %10, %cst_10 {dimension_numbers = #tpu.dot_dimension_numbers<[1], [0], [0], [1], [0, 0, 1, 1], [], []>} : vector<16x128xbf16>, vector<128x128xbf16>, vector<16x128xf32> -> vector<16x128xf32>
    %13 = vector.broadcast %11 : vector<1x128xf32> to vector<16x128xf32>
    %14 = arith.addf %12, %13 : vector<16x128xf32>
    %cst_11 = arith.constant 0.000000e+00 : f32
    %15 = vector.broadcast %cst_11 : f32 to vector<16x128xf32>
    %16 = arith.maximumf %14, %15 : vector<16x128xf32>
    %17 = arith.truncf %16 : vector<16x128xf32> to vector<16x128xbf16>
    %c0_12 = arith.constant 0 : index
    %c0_13 = arith.constant 0 : index
    %18 = vector.load %arg6[%c0_12, %c0_13] : memref<128x4xbf16, #tpu.memory_space<vmem>>, vector<128x4xbf16>
    %c0_14 = arith.constant 0 : index
    %c0_15 = arith.constant 0 : index
    %19 = vector.load %arg7[%c0_14, %c0_15] : memref<1x4xf32, #tpu.memory_space<vmem>>, vector<1x4xf32>
    %cst_16 = arith.constant dense<0.000000e+00> : vector<16x4xf32>
    %20 = tpu.matmul %17, %18, %cst_16 {dimension_numbers = #tpu.dot_dimension_numbers<[1], [0], [0], [1], [0, 0, 1, 1], [], []>} : vector<16x128xbf16>, vector<128x4xbf16>, vector<16x4xf32> -> vector<16x4xf32>
    %21 = vector.broadcast %19 : vector<1x4xf32> to vector<16x4xf32>
    %22 = arith.addf %20, %21 : vector<16x4xf32>
    %c0_17 = arith.constant 0 : index
    %c0_18 = arith.constant 0 : index
    %23 = vector.load %arg8[%c0_17, %c0_18] : memref<16x4xf32, #tpu.memory_space<vmem>>, vector<16x4xf32>
    tpu.vector_store %arg8[%c0_17, %c0_18], %22 {strides = array<i32>} : memref<16x4xf32, #tpu.memory_space<vmem>>, vector<16x4xf32>,
    return
  }
  func.func @transform_0(%arg0: i32) -> (i32, i32) {
    %c0_i32 = arith.constant 0 : i32
    %c0_i32_0 = arith.constant 0 : i32
    return %arg0, %c0_i32 : i32, i32
  }
  func.func @transform_1(%arg0: i32) -> (i32, i32) {
    %c0_i32 = arith.constant 0 : i32
    %c0_i32_0 = arith.constant 0 : i32
    %c0_i32_1 = arith.constant 0 : i32
    return %c0_i32, %c0_i32_0 : i32, i32
  }
  func.func @transform_2(%arg0: i32) -> (i32, i32) {
    %c0_i32 = arith.constant 0 : i32
    %c0_i32_0 = arith.constant 0 : i32
    %c0_i32_1 = arith.constant 0 : i32
    return %c0_i32, %c0_i32_0 : i32, i32
  }
  func.func @transform_3(%arg0: i32) -> (i32, i32) {
    %c0_i32 = arith.constant 0 : i32
    %c0_i32_0 = arith.constant 0 : i32
    %c0_i32_1 = arith.constant 0 : i32
    return %c0_i32, %c0_i32_0 : i32, i32
  }
  func.func @transform_4(%arg0: i32) -> (i32, i32) {
    %c0_i32 = arith.constant 0 : i32
    %c0_i32_0 = arith.constant 0 : i32
    %c0_i32_1 = arith.constant 0 : i32
    return %c0_i32, %c0_i32_0 : i32, i32
  }
  func.func @transform_5(%arg0: i32) -> (i32, i32) {
    %c0_i32 = arith.constant 0 : i32
    %c0_i32_0 = arith.constant 0 : i32
    %c0_i32_1 = arith.constant 0 : i32
    return %c0_i32, %c0_i32_0 : i32, i32
  }
  func.func @transform_6(%arg0: i32) -> (i32, i32) {
    %c0_i32 = arith.constant 0 : i32
    %c0_i32_0 = arith.constant 0 : i32
    %c0_i32_1 = arith.constant 0 : i32
    return %c0_i32, %c0_i32_0 : i32, i32
  }
  func.func @transform_7(%arg0: i32) -> (i32, i32) {
    %c0_i32 = arith.constant 0 : i32
    %c0_i32_0 = arith.constant 0 : i32
    return %arg0, %c0_i32 : i32, i32
  }
}

</mosaic_0001>

<llo_original>
// kernel: tpu_custom_call.1
$region0: #{tpu_custom_call.1}
  #allocation0 [shape = 'u32[]', space=smem, size = 0x4, offset = 0x4, fixed_abs, tag = 'smem constant byte address 0x4 - core index']
  #allocation1 [shape = 'u32[144,128]{1,0:T(1,128)}', space=vmem, size = 0x12000, scoped, tag = 'internal scratch']
  %s0 = inlined_call_operand.hbm [shape: f32[16,16], index: 0, kind: input, shape index: {}]
  %s1 = inlined_call_operand.hbm [shape: bf16[16,128], index: 1, kind: input, shape index: {}]
  %s2 = inlined_call_operand.vmem [shape: f32[1,128], index: 2, kind: input, shape index: {}]
  %s3 = inlined_call_operand.vmem [shape: bf16[128,128], index: 3, kind: input, shape index: {}]
  %s4 = inlined_call_operand.vmem [shape: f32[1,128], index: 4, kind: input, shape index: {}]
  %s5 = inlined_call_operand.vmem [shape: bf16[128,4], index: 5, kind: input, shape index: {}]
  %s6 = inlined_call_operand.vmem [shape: f32[1,4], index: 6, kind: input, shape index: {}]
  %s7 = inlined_call_operand.vmem [shape: f32[16,4], index: 7, kind: output, shape index: {}]
  %s8 = sld [smem:[#allocation0]]
  $region46: #{tpu_custom_call.1} parent=0
    _
  %s10 = ssub.s32 1, %s8
  %s11 = scalar_select 0, %s10, %s8
  $region1: #{tpu_custom_call.1} parent=0
    #allocation2 [shape = 'u8[8192]{0}', space=vmem, size = 0x2000, scoped, tag = 'input window, operand 0, single buffered']
    #allocation3 [shape = 's32[1]{0}', space=sflag, size = 0x4, scoped, tag = 'scoped memory for tpu_custom_call.1']
    #allocation4 [shape = 'u8[4096]{0}', space=vmem, size = 0x1000, scoped, tag = 'input window, operand 1, single buffered']
    #allocation5 [shape = 's32[1]{0}', space=sflag, size = 0x4, scoped, tag = 'scoped memory for tpu_custom_call.1']
    %12 = vsyncpa [#allocation3], 0
    %13 = vsyncpa [#allocation5], 0
    // Predicated region
    $region2: #{tpu_custom_call.1} parent=1 // pred_check
      _
    $region3: #{tpu_custom_call.1} parent=1 // pred_check_branch
      %15 = sbr.rel (0) target = $region5
    $region4: #{tpu_custom_call.1} parent=1 // pred_region
      %s17 = ssub.s32 256, 256
      %18 = vsyncadd [#allocation3], %s17
      %s19 = sshll.u32 [#allocation2], 4
      %s20 = int_to_ptr.vmem [resolvable:$true] %s19
      %25 = dma.hbm_to_vmem [thread:$0]  %s0, 256, %s20, [#allocation3], 128, 128, 8
    $region5: #{tpu_custom_call.1} parent=1 // pred_fallthru
      _
    // Predicated region
    $region6: #{tpu_custom_call.1} parent=1 // pred_check
      _
    $region7: #{tpu_custom_call.1} parent=1 // pred_check_branch
      %27 = sbr.rel (0) target = $region9
    $region8: #{tpu_custom_call.1} parent=1 // pred_region
      %s29 = ssub.s32 128, 128
      %30 = vsyncadd [#allocation5], %s29
      %s31 = sshll.u32 [#allocation4], 4
      %s32 = int_to_ptr.vmem [resolvable:$true] %s31
      %37 = dma.hbm_to_vmem [thread:$0]  %s1, 128, %s32, [#allocation5], 64, 64, 4
    $region9: #{tpu_custom_call.1} parent=1 // pred_fallthru
      _
    // Predicated region
    $region10: #{tpu_custom_call.1} parent=1 // pred_check
      _
    $region11: #{tpu_custom_call.1} parent=1 // pred_check_branch
      %39 = sbr.rel (0) target = $region13
    $region12: #{tpu_custom_call.1} parent=1 // pred_region
      _
    $region13: #{tpu_custom_call.1} parent=1 // pred_fallthru
      _
    // Predicated region
    $region14: #{tpu_custom_call.1} parent=1 // pred_check
      _
    $region15: #{tpu_custom_call.1} parent=1 // pred_check_branch
      %41 = sbr.rel (0) target = $region17
    $region16: #{tpu_custom_call.1} parent=1 // pred_region
      _
    $region17: #{tpu_custom_call.1} parent=1 // pred_fallthru
      _
    // Predicated region
    $region18: #{tpu_custom_call.1} parent=1 // pred_check
      _
    $region19: #{tpu_custom_call.1} parent=1 // pred_check_branch
      %43 = sbr.rel (0) target = $region21
    $region20: #{tpu_custom_call.1} parent=1 // pred_region
      _
    $region21: #{tpu_custom_call.1} parent=1 // pred_fallthru
      _
    // Predicated region
    $region22: #{tpu_custom_call.1} parent=1 // pred_check
      _
    $region23: #{tpu_custom_call.1} parent=1 // pred_check_branch
      %45 = sbr.rel (0) target = $region25
    $region24: #{tpu_custom_call.1} parent=1 // pred_region
      _
    $region25: #{tpu_custom_call.1} parent=1 // pred_fallthru
      _
    // Predicated region
    $region26: #{tpu_custom_call.1} parent=1 // pred_check
      _
    $region27: #{tpu_custom_call.1} parent=1 // pred_check_branch
      %47 = sbr.rel (0) target = $region29
    $region28: #{tpu_custom_call.1} parent=1 // pred_region
      _
    $region29: #{tpu_custom_call.1} parent=1 // pred_fallthru
      _
    // Predicated region
    $region30: #{tpu_custom_call.1} parent=1 // pred_check
      _
    $region31: #{tpu_custom_call.1} parent=1 // pred_check_branch
      %49 = sbr.rel (0) target = $region33
    $region32: #{tpu_custom_call.1} parent=1 // pred_region
      %50 = dma.done [#allocation3], 256
    $region33: #{tpu_custom_call.1} parent=1 // pred_fallthru
      _
    // Predicated region
    $region34: #{tpu_custom_call.1} parent=1 // pred_check
      _
    $region35: #{tpu_custom_call.1} parent=1 // pred_check_branch
      %52 = sbr.rel (0) target = $region37
    $region36: #{tpu_custom_call.1} parent=1 // pred_region
      %53 = dma.done [#allocation5], 128
    $region37: #{tpu_custom_call.1} parent=1 // pred_fallthru
      _
    %v55 = vld [vmem:[#allocation2] sm:$0xff]
    %v56 = vld [vmem:[#allocation2 + $0x8] sm:$0xff]
    %v57 = vpack.c.bf16 %v56, %v55
    %v58 = vld [vmem:[#allocation4] sm:$0xf]
    %v59 = vld [vmem:[#allocation4 + $0x4] sm:$0xf]
    %v60 = vld [vmem:[%s2] sm:$0x1]
    %v62 = vlaneseq
    %v63 = vshrl.u32 %v62, 7
    %v64 = vsub.s32 0, %v63
    %v65 = vrot.slane %v60, %v64
    %v69 = vunpack.c.l.b16 %v58
    %v70 = vunpack.c.l.b16 %v59
    %v71 = vpack.c.b16 %v70, %v69
    %vm73 = vcmask 130048
    %v75 = vsel %vm73, %v57, 0
    %77 = vmatprep.subr.bf16.mxu0 0
    %78 = vmatpush1.bf16.msra.mxu0 0
    %79 = vmatprep.subr.bf16.mxu0 0
    %80 = vmatpush1.bf16.msra.mxu0 0
    %81 = vmatprep.subr.bf16.mxu0 0
    %82 = vmatpush1.bf16.msra.mxu0 0
    %83 = vmatprep.subr.bf16.mxu0 0
    %84 = vmatpush1.bf16.msra.mxu0 0
    %85 = vmatprep.subr.bf16.mxu0 0
    %86 = vmatpush1.bf16.msra.mxu0 0
    %87 = vmatprep.subr.bf16.mxu0 0
    %88 = vmatpush1.bf16.msra.mxu0 0
    %89 = vmatprep.subr.bf16.mxu0 0
    %90 = vmatpush1.bf16.msra.mxu0 0
    %91 = vmatprep.subr.bf16.mxu0 0
    %92 = vmatpush1.bf16.msra.mxu0 %v71
    %93 = vmatprep.subr.bf16.mxu0 0
    %94 = vmatpush2.bf16.msra.mxu0 0
    %95 = vmatprep.subr.bf16.mxu0 0
    %96 = vmatpush2.bf16.msra.mxu0 0
    %97 = vmatprep.subr.bf16.mxu0 0
    %98 = vmatpush2.bf16.msra.mxu0 0
    %99 = vmatprep.subr.bf16.mxu0 0
    %100 = vmatpush2.bf16.msra.mxu0 0
    %101 = vmatprep.subr.bf16.mxu0 0
    %102 = vmatpush2.bf16.msra.mxu0 0
    %103 = vmatprep.subr.bf16.mxu0 0
    %104 = vmatpush2.bf16.msra.mxu0 0
    %105 = vmatprep.subr.bf16.mxu0 0
    %106 = vmatpush2.bf16.msra.mxu0 0
    %107 = vmatprep.subr.bf16.mxu0 0
    %108 = vmatpush2.bf16.msra.mxu0 0
    %109 = vmatprep.mubr.bf16.mxu0 0
    %110 = vmatmul.mubr.bf16.gmra.mxu0 %v75
    %v111 = vpop.f32.mrf.mxu0
    %v112 = vadd.f32 %v65, %v111
    %v113 = vpop.f32.mrf.mxu0
    %v114 = vpop.f32.mrf.mxu0
    %v115 = vadd.f32 %v65, %v114
    %v116 = vpop.f32.mrf.mxu0
    %117 = vdwg.mxu0
    %v118 = vmax.f32 %v112, 0.0
    %v119 = vmax.f32 %v115, 0.0
    %v120 = vpack.c.bf16 %v119, %v118
    %v121 = vld [vmem:[%s3] sm:$0xf]
    %v122 = vld [vmem:[%s3 + $0x4] sm:$0xf]
    %v123 = vld [vmem:[%s3 + $0x8] sm:$0xf]
    %v124 = vld [vmem:[%s3 + $0xc] sm:$0xf]
    %v125 = vld [vmem:[%s3 + $0x10] sm:$0xf]
    %v126 = vld [vmem:[%s3 + $0x14] sm:$0xf]
    %v127 = vld [vmem:[%s3 + $0x18] sm:$0xf]
    %v128 = vld [vmem:[%s3 + $0x1c] sm:$0xf]
    %v129 = vld [vmem:[%s3 + $0x20] sm:$0xf]
    %v130 = vld [vmem:[%s3 + $0x24] sm:$0xf]
    %v131 = vld [vmem:[%s3 + $0x28] sm:$0xf]
    %v132 = vld [vmem:[%s3 + $0x2c] sm:$0xf]
    %v133 = vld [vmem:[%s3 + $0x30] sm:$0xf]
    %v134 = vld [vmem:[%s3 + $0x34] sm:$0xf]
    %v135 = vld [vmem:[%s3 + $0x38] sm:$0xf]
    %v136 = vld [vmem:[%s3 + $0x3c] sm:$0xf]
    %v137 = vld [vmem:[%s4] sm:$0x1]
    %v139 = vlaneseq
    %v140 = vshrl.u32 %v139, 7
    %v141 = vsub.s32 0, %v140
    %v142 = vrot.slane %v137, %v141
    %v160 = vunpack.c.l.b16 %v121
    %v161 = vunpack.c.l.b16 %v122
    %v162 = vunpack.c.l.b16 %v123
    %v163 = vunpack.c.l.b16 %v124
    %v164 = vunpack.c.l.b16 %v125
    %v165 = vunpack.c.l.b16 %v126
    %v166 = vunpack.c.l.b16 %v127
    %v167 = vunpack.c.l.b16 %v128
    %v168 = vunpack.c.l.b16 %v129
    %v169 = vunpack.c.l.b16 %v130
    %v170 = vunpack.c.l.b16 %v131
    %v171 = vunpack.c.l.b16 %v132
    %v172 = vunpack.c.l.b16 %v133
    %v173 = vunpack.c.l.b16 %v134
    %v174 = vunpack.c.l.b16 %v135
    %v175 = vunpack.c.l.b16 %v136
    %v176 = vpack.c.b16 %v161, %v160
    %v177 = vpack.c.b16 %v163, %v162
    %v178 = vpack.c.b16 %v165, %v164
    %v179 = vpack.c.b16 %v167, %v166
    %v180 = vpack.c.b16 %v169, %v168
    %v181 = vpack.c.b16 %v171, %v170
    %v182 = vpack.c.b16 %v173, %v172
    %v183 = vpack.c.b16 %v175, %v174
    %192 = vmatprep.subr.bf16.mxu0 0
    %193 = vmatpush1.bf16.msra.mxu0 %v183
    %194 = vmatprep.subr.bf16.mxu0 0
    %195 = vmatpush1.bf16.msra.mxu0 %v182
    %196 = vmatprep.subr.bf16.mxu0 0
    %197 = vmatpush1.bf16.msra.mxu0 %v181
    %198 = vmatprep.subr.bf16.mxu0 0
    %199 = vmatpush1.bf16.msra.mxu0 %v180
    %200 = vmatprep.subr.bf16.mxu0 0
    %201 = vmatpush1.bf16.msra.mxu0 %v179
    %202 = vmatprep.subr.bf16.mxu0 0
    %203 = vmatpush1.bf16.msra.mxu0 %v178
    %204 = vmatprep.subr.bf16.mxu0 0
    %205 = vmatpush1.bf16.msra.mxu0 %v177
    %206 = vmatprep.subr.bf16.mxu0 0
    %207 = vmatpush1.bf16.msra.mxu0 %v176
    %208 = vmatprep.subr.bf16.mxu0 0
    %209 = vmatpush2.bf16.msra.mxu0 0
    %210 = vmatprep.subr.bf16.mxu0 0
    %211 = vmatpush2.bf16.msra.mxu0 0
    %212 = vmatprep.subr.bf16.mxu0 0
    %213 = vmatpush2.bf16.msra.mxu0 0
    %214 = vmatprep.subr.bf16.mxu0 0
    %215 = vmatpush2.bf16.msra.mxu0 0
    %216 = vmatprep.subr.bf16.mxu0 0
    %217 = vmatpush2.bf16.msra.mxu0 0
    %218 = vmatprep.subr.bf16.mxu0 0
    %219 = vmatpush2.bf16.msra.mxu0 0
    %220 = vmatprep.subr.bf16.mxu0 0
    %221 = vmatpush2.bf16.msra.mxu0 0
    %222 = vmatprep.subr.bf16.mxu0 0
    %223 = vmatpush2.bf16.msra.mxu0 0
    %224 = vmatprep.mubr.bf16.mxu0 0
    %225 = vmatmul.mubr.bf16.gmra.mxu0 %v120
    %v226 = vpop.f32.mrf.mxu0
    %v227 = vadd.f32 %v142, %v226
    %v228 = vpop.f32.mrf.mxu0
    %v229 = vpop.f32.mrf.mxu0
    %v230 = vadd.f32 %v142, %v229
    %v231 = vpop.f32.mrf.mxu0
    %232 = vdwg.mxu0
    %v233 = vmax.f32 %v227, 0.0
    %v234 = vmax.f32 %v230, 0.0
    %v235 = vpack.c.bf16 %v234, %v233
    %v236 = vld [vmem:[%s5] sm:$0xf]
    %v237 = vld [vmem:[%s5 + $0x4] sm:$0xf]
    %v238 = vld [vmem:[%s5 + $0x8] sm:$0xf]
    %v239 = vld [vmem:[%s5 + $0xc] sm:$0xf]
    %v240 = vld [vmem:[%s5 + $0x10] sm:$0xf]
    %v241 = vld [vmem:[%s5 + $0x14] sm:$0xf]
    %v242 = vld [vmem:[%s5 + $0x18] sm:$0xf]
    %v243 = vld [vmem:[%s5 + $0x1c] sm:$0xf]
    %v244 = vld [vmem:[%s5 + $0x20] sm:$0xf]
    %v245 = vld [vmem:[%s5 + $0x24] sm:$0xf]
    %v246 = vld [vmem:[%s5 + $0x28] sm:$0xf]
    %v247 = vld [vmem:[%s5 + $0x2c] sm:$0xf]
    %v248 = vld [vmem:[%s5 + $0x30] sm:$0xf]
    %v249 = vld [vmem:[%s5 + $0x34] sm:$0xf]
    %v250 = vld [vmem:[%s5 + $0x38] sm:$0xf]
    %v251 = vld [vmem:[%s5 + $0x3c] sm:$0xf]
    %v252 = vld [vmem:[%s6] sm:$0x1]
    %v254 = vlaneseq
    %v255 = vshrl.u32 %v254, 7
    %v256 = vsub.s32 0, %v255
    %v257 = vrot.slane %v252, %v256
    %v275 = vunpack.c.l.b16 %v236
    %v276 = vunpack.c.l.b16 %v237
    %v277 = vunpack.c.l.b16 %v238
    %v278 = vunpack.c.l.b16 %v239
    %v279 = vunpack.c.l.b16 %v240
    %v280 = vunpack.c.l.b16 %v241
    %v281 = vunpack.c.l.b16 %v242
    %v282 = vunpack.c.l.b16 %v243
    %v283 = vunpack.c.l.b16 %v244
    %v284 = vunpack.c.l.b16 %v245
    %v285 = vunpack.c.l.b16 %v246
    %v286 = vunpack.c.l.b16 %v247
    %v287 = vunpack.c.l.b16 %v248
    %v288 = vunpack.c.l.b16 %v249
    %v289 = vunpack.c.l.b16 %v250
    %v290 = vunpack.c.l.b16 %v251
    %v291 = vpack.c.b16 %v276, %v275
    %v292 = vpack.c.b16 %v278, %v277
    %v293 = vpack.c.b16 %v280, %v279
    %v294 = vpack.c.b16 %v282, %v281
    %v295 = vpack.c.b16 %v284, %v283
    %v296 = vpack.c.b16 %v286, %v285
    %v297 = vpack.c.b16 %v288, %v287
    %v298 = vpack.c.b16 %v290, %v289
    %307 = vmatprep.subr.bf16.mxu0 0
    %308 = vmatpush1.bf16.msra.mxu0 %v298
    %309 = vmatprep.subr.bf16.mxu0 0
    %310 = vmatpush1.bf16.msra.mxu0 %v297
    %311 = vmatprep.subr.bf16.mxu0 0
    %312 = vmatpush1.bf16.msra.mxu0 %v296
    %313 = vmatprep.subr.bf16.mxu0 0
    %314 = vmatpush1.bf16.msra.mxu0 %v295
    %315 = vmatprep.subr.bf16.mxu0 0
    %316 = vmatpush1.bf16.msra.mxu0 %v294
    %317 = vmatprep.subr.bf16.mxu0 0
    %318 = vmatpush1.bf16.msra.mxu0 %v293
    %319 = vmatprep.subr.bf16.mxu0 0
    %320 = vmatpush1.bf16.msra.mxu0 %v292
    %321 = vmatprep.subr.bf16.mxu0 0
    %322 = vmatpush1.bf16.msra.mxu0 %v291
    %323 = vmatprep.subr.bf16.mxu0 0
    %324 = vmatpush2.bf16.msra.mxu0 0
    %325 = vmatprep.subr.bf16.mxu0 0
    %326 = vmatpush2.bf16.msra.mxu0 0
    %327 = vmatprep.subr.bf16.mxu0 0
    %328 = vmatpush2.bf16.msra.mxu0 0
    %329 = vmatprep.subr.bf16.mxu0 0
    %330 = vmatpush2.bf16.msra.mxu0 0
    %331 = vmatprep.subr.bf16.mxu0 0
    %332 = vmatpush2.bf16.msra.mxu0 0
    %333 = vmatprep.subr.bf16.mxu0 0
    %334 = vmatpush2.bf16.msra.mxu0 0
    %335 = vmatprep.subr.bf16.mxu0 0
    %336 = vmatpush2.bf16.msra.mxu0 0
    %337 = vmatprep.subr.bf16.mxu0 0
    %338 = vmatpush2.bf16.msra.mxu0 0
    %339 = vmatprep.mubr.bf16.mxu0 0
    %340 = vmatmul.mubr.bf16.gmra.mxu0 %v235
    %v341 = vpop.f32.mrf.mxu0
    %v342 = vadd.f32 %v257, %v341
    %v343 = vpop.f32.mrf.mxu0
    %v344 = vpop.f32.mrf.mxu0
    %v345 = vadd.f32 %v257, %v344
    %v346 = vpop.f32.mrf.mxu0
    %347 = vdwg.mxu0
    %vm348 = vcmask 31744
    %349 = vst.msk [vmem:[%s7] sm:$0xff] %vm348, %v342
    %350 = vst.msk [vmem:[%s7 + $0x8] sm:$0xff] %vm348, %v345
    // Predicated region
    $region38: #{tpu_custom_call.1} parent=1 // pred_check
      _
    $region39: #{tpu_custom_call.1} parent=1 // pred_check_branch
      %352 = sbr.rel (0) target = $region41
    $region40: #{tpu_custom_call.1} parent=1 // pred_region
      _
    $region41: #{tpu_custom_call.1} parent=1 // pred_fallthru
      _
    // Predicated region
    $region42: #{tpu_custom_call.1} parent=1 // pred_check
      _
    $region43: #{tpu_custom_call.1} parent=1 // pred_check_branch
      %354 = sbr.rel (0) target = $region45
    $region44: #{tpu_custom_call.1} parent=1 // pred_region
      _
    $region45: #{tpu_custom_call.1} parent=1 // pred_fallthru
      _
    %355 = vsyncpa [#allocation3], 1
    %356 = vsyncpa [#allocation5], 1

</llo_original>
